<compile_context>
chip_gen: v5e
topology: v5e:2x2
jax: 0.10.0
libtpu: 0.0.40
codegen_flags: <defaults>
</compile_context>

<pallas_src>
import functools

import jax
import jax.numpy as jnp
from jax.experimental import pallas as pl
from jax.experimental.pallas import tpu as pltpu


def _round_up(x: int, m: int) -> int:
    return ((x + m - 1) // m) * m


def tanh_linear_kernel(x_ref, w_ref, b_ref, o_ref):
    # x_ref: (tm, tk) compute dtype, w_ref: (tk, tn) compute dtype (weight is
    # pre-transposed to (In, Out) at init), b_ref: (1, tn) f32,
    # o_ref: (tm, tn) f32 — doubles as the k-axis accumulator (its block index
    # is constant over k so it stays resident in VMEM).
    k = pl.program_id(2)

    @pl.when(k == 0)
    def _init():
        o_ref[...] = jnp.zeros_like(o_ref)

    o_ref[...] += jnp.dot(
        x_ref[...], w_ref[...], preferred_element_type=jnp.float32
    )

    @pl.when(k == pl.num_programs(2) - 1)
    def _epilogue():
        # Bias add + tanh exactly once per output tile.
        o_ref[...] = jnp.tanh(o_ref[...] + b_ref[...])


@functools.partial(jax.jit, static_argnames=("out_features", "tm", "tn", "tk"))
def _tanh_linear_fwd(x, weight_t, bias2d, *, out_features, tm, tn, tk):
    B, In = x.shape
    Kp, Np = weight_t.shape

    # Row tile never exceeds the (sublane-aligned) batch.
    tm = min(tm, _round_up(B, 8))
    Mp = _round_up(B, tm)

    # Per-call work on x only: cast to the MXU compute dtype and zero-pad to
    # the tile grid (zeros are inert in the K reduction).
    x_p = x.astype(weight_t.dtype)
    if (Mp, Kp) != (B, In):
        x_p = jnp.pad(x_p, ((0, Mp - B), (0, Kp - In)))

    grid_m, grid_n, grid_k = Mp // tm, Np // tn, Kp // tk

    # Weight-bandwidth-bound regime (small batch, several K steps): buffer the
    # dominant weight stream 3 deep so DMA latency hides behind the k loop.
    if grid_m == 1 and grid_k >= 3:
        w_spec = pl.BlockSpec((tk, tn), lambda i, j, k: (k, j),
                              pipeline_mode=pl.Buffered(3))
    else:
        w_spec = pl.BlockSpec((tk, tn), lambda i, j, k: (k, j))

    itemsize = jnp.dtype(weight_t.dtype).itemsize
    cost = pl.CostEstimate(
        flops=2 * Mp * Kp * Np,
        transcendentals=Mp * Np,
        bytes_accessed=(Mp * Kp + Kp * Np) * itemsize + (Mp * Np + Np) * 4,
    )

    out = pl.pallas_call(
        tanh_linear_kernel,
        out_shape=jax.ShapeDtypeStruct((Mp, Np), jnp.float32),
        grid_spec=pltpu.PrefetchScalarGridSpec(
            num_scalar_prefetch=0,
            grid=(grid_m, grid_n, grid_k),
            in_specs=[
                pl.BlockSpec((tm, tk), lambda i, j, k: (i, k)),  # x tile
                w_spec,                                          # weight (In, Out) tile
                pl.BlockSpec((1, tn), lambda i, j, k: (0, j)),   # bias tile
            ],
            out_specs=pl.BlockSpec((tm, tn), lambda i, j, k: (i, j)),
        ),
        compiler_params=pltpu.CompilerParams(
            dimension_semantics=("parallel", "parallel", "arbitrary"),
            # Raise v5e's 16 MiB scoped default; stays under v7x's 64 MiB VMEM.
            vmem_limit_bytes=48 << 20,
        ),
        cost_estimate=cost,
    )(x_p, weight_t, bias2d)

    # Slice back only when padding was actually applied, so the aligned common
    # case pays no extra HBM pass over the output.
    if (Mp, Np) != (B, out_features):
        out = out[:B, :out_features]
    return out


class TanhLayerPallas:
    """Pallas TPU equivalent of the PyTorch TanhLayer: y = tanh(x @ W.T + b)."""

    def __init__(self, weight, bias, *, tm=512, tn=512, tk=1024,
                 compute_dtype=jnp.bfloat16):
        out_features, in_features = weight.shape
        assert bias.shape == (out_features,)

        # Clamp tiles to the padded problem; prefer 256-aligned N/K tiles
        # (v6e/v7x MXUs are 2x256x256; v5e is fine with any 128 multiple).
        self.tm = tm
        self.tn = min(tn, _round_up(out_features, 256))
        self.tk = min(tk, _round_up(in_features, 256))
        self.out_features = out_features
        self.in_features = in_features

        Np = _round_up(out_features, self.tn)
        Kp = _round_up(in_features, self.tk)

        # One-time (init-time) pad + transpose + cast of the parameters:
        #   * zero-padding keeps the K reduction exact and the output stores
        #     lane-dense,
        #   * the (Kp, Np) layout makes the in-kernel dot canonical,
        #   * bf16 weights halve HBM weight traffic; accumulation stays f32.
        w = jnp.pad(weight.astype(jnp.float32),
                    ((0, Np - out_features), (0, Kp - in_features)))
        self.weight_t = jnp.asarray(w.T, dtype=compute_dtype)            # (Kp, Np)
        self.bias2d = jnp.pad(bias.astype(jnp.float32),
                              (0, Np - out_features)).reshape(1, Np)     # (1, Np)

    def __call__(self, x):
        assert x.shape[-1] == self.in_features
        return _tanh_linear_fwd(
            x, self.weight_t, self.bias2d,
            out_features=self.out_features,
            tm=self.tm, tn=self.tn, tk=self.tk)


def _init_linear(key, input_size, output_size):
    """Deterministic init mimicking nn.Linear's uniform(-1/sqrt(In), 1/sqrt(In))."""
    kw, kb = jax.random.split(key)
    bound = 1.0 / jnp.sqrt(jnp.float32(input_size))
    weight = jax.random.uniform(kw, (output_size, input_size),
                                dtype=jnp.float32, minval=-bound, maxval=bound)
    bias = jax.random.uniform(kb, (output_size,),
                              dtype=jnp.float32, minval=-bound, maxval=bound)
    return weight, bias


if __name__ == "__main__":
    key = jax.random.PRNGKey(0)
    k1, k2, k3, k4, k5, k6 = jax.random.split(key, 6)

    # --- Small shape consistent with the module (bf16 operands, f32 accum) ---
    batch, input_size, output_size = 8, 32, 16
    x = jax.random.normal(k1, (batch, input_size), dtype=jnp.float32)
    weight, bias = _init_linear(k2, input_size, output_size)

    layer = TanhLayerPallas(weight, bias)                  # bf16 compute (default)
    out = jax.block_until_ready(layer(x))
    ref = jnp.tanh(x @ weight.T + bias)
    assert out.shape == (batch, output_size)
    assert out.dtype == jnp.float32
    assert jnp.allclose(out, ref, atol=2e-2, rtol=2e-2), "bf16 path mismatch"

    # --- Non-aligned shape exercising the tiled (M, N, K) grid, f32 compute ---
    b2, in2, out2 = 96, 320, 200
    x2 = jax.random.normal(k3, (b2, in2), dtype=jnp.float32)
    w2, bb2 = _init_linear(k4, in2, out2)
    layer2 = TanhLayerPallas(w2, bb2, tm=64, tn=128, tk=128,
                             compute_dtype=jnp.float32)
    out2_v = jax.block_until_ready(layer2(x2))
    ref2 = jnp.tanh(x2 @ w2.T + bb2)
    assert out2_v.shape == (b2, out2)
    assert jnp.allclose(out2_v, ref2, atol=1e-4, rtol=1e-4), "f32 path mismatch"

    # --- Small-batch / deep-K regime exercising the Buffered(3) weight stream -
    b3, in3, out3 = 8, 1024, 256
    x3 = jax.random.normal(k5, (b3, in3), dtype=jnp.float32)
    w3, bb3 = _init_linear(k6, in3, out3)
    layer3 = TanhLayerPallas(w3, bb3, tn=256, tk=256)      # grid (1, 1, 4)
    out3_v = jax.block_until_ready(layer3(x3))
    ref3 = jnp.tanh(x3 @ w3.T + bb3)
    assert out3_v.shape == (b3, out3)
    assert jnp.allclose(out3_v, ref3, atol=2e-2, rtol=2e-2), "buffered path mismatch"

    # TODO(synk): at these toy sizes a standalone pallas_call is launch-overhead
    # dominated; in a real model this layer should be fused with its neighbours.
    print("KERNEL_OK")
</pallas_src>

<mosaic_0001>
module attributes {stable_mosaic.version = 11 : i64} {
  func.func @tanh_linear_kernel(%arg0: i32, %arg1: i32, %arg2: i32, %arg3: memref<8x256xbf16, #tpu.memory_space<vmem>>, %arg4: memref<256x256xbf16, #tpu.memory_space<vmem>>, %arg5: memref<1x256xf32, #tpu.memory_space<vmem>>, %arg6: memref<8x256xf32, #tpu.memory_space<vmem>>) attributes {dimension_semantics = [#tpu.dimension_semantics<parallel>, #tpu.dimension_semantics<parallel>, #tpu.dimension_semantics<arbitrary>], iteration_bounds = array<i64: 1, 1, 1>, scalar_prefetch = 0 : i64, scratch_operands = 0 : i64, tpu.core_type = #tpu.core_type<tc>, window_params = [{transform_indices = @transform_0, window_bounds = array<i64: 8, 256>}, {transform_indices = @transform_1, window_bounds = array<i64: 256, 256>}, {transform_indices = @transform_2, window_bounds = array<i64: 1, 256>}, {transform_indices = @transform_3, window_bounds = array<i64: 8, 256>}]} {
    %c0_i32 = arith.constant 0 : i32
    %0 = arith.cmpi eq, %arg2, %c0_i32 : i32
    %1 = arith.extui %0 : i1 to i32
    %c0_i32_0 = arith.constant 0 : i32
    %2 = arith.cmpi ne, %1, %c0_i32_0 : i32
    scf.if %2 {
      %cst_10 = arith.constant 0.000000e+00 : f32
      %12 = vector.broadcast %cst_10 : f32 to vector<8x256xf32>
      %c0_11 = arith.constant 0 : index
      %c0_12 = arith.constant 0 : index
      %13 = vector.load %arg6[%c0_11, %c0_12] : memref<8x256xf32, #tpu.memory_space<vmem>>, vector<8x256xf32>
      tpu.vector_store %arg6[%c0_11, %c0_12], %12 {strides = array<i32>} : memref<8x256xf32, #tpu.memory_space<vmem>>, vector<8x256xf32>,
    } else {
    }
    %c0 = arith.constant 0 : index
    %c0_1 = arith.constant 0 : index
    %3 = vector.load %arg6[%c0, %c0_1] : memref<8x256xf32, #tpu.memory_space<vmem>>, vector<8x256xf32>
    %c0_2 = arith.constant 0 : index
    %c0_3 = arith.constant 0 : index
    %4 = vector.load %arg3[%c0_2, %c0_3] : memref<8x256xbf16, #tpu.memory_space<vmem>>, vector<8x256xbf16>
    %c0_4 = arith.constant 0 : index
    %c0_5 = arith.constant 0 : index
    %5 = vector.load %arg4[%c0_4, %c0_5] : memref<256x256xbf16, #tpu.memory_space<vmem>>, vector<256x256xbf16>
    %cst = arith.constant dense<0.000000e+00> : vector<8x256xf32>
    %6 = tpu.matmul %4, %5, %cst {dimension_numbers = #tpu.dot_dimension_numbers<[1], [0], [0], [1], [0, 0, 1, 1], [], []>} : vector<8x256xbf16>, vector<256x256xbf16>, vector<8x256xf32> -> vector<8x256xf32>
    %7 = arith.addf %3, %6 : vector<8x256xf32>
    %c0_6 = arith.constant 0 : index
    %c0_7 = arith.constant 0 : index
    %8 = vector.load %arg6[%c0_6, %c0_7] : memref<8x256xf32, #tpu.memory_space<vmem>>, vector<8x256xf32>
    tpu.vector_store %arg6[%c0_6, %c0_7], %7 {strides = array<i32>} : memref<8x256xf32, #tpu.memory_space<vmem>>, vector<8x256xf32>,
    %c0_i32_8 = arith.constant 0 : i32
    %9 = arith.cmpi eq, %arg2, %c0_i32_8 : i32
    %10 = arith.extui %9 : i1 to i32
    %c0_i32_9 = arith.constant 0 : i32
    %11 = arith.cmpi ne, %10, %c0_i32_9 : i32
    scf.if %11 {
      %c0_10 = arith.constant 0 : index
      %c0_11 = arith.constant 0 : index
      %12 = vector.load %arg6[%c0_10, %c0_11] : memref<8x256xf32, #tpu.memory_space<vmem>>, vector<8x256xf32>
      %c0_12 = arith.constant 0 : index
      %c0_13 = arith.constant 0 : index
      %13 = vector.load %arg5[%c0_12, %c0_13] : memref<1x256xf32, #tpu.memory_space<vmem>>, vector<1x256xf32>
      %14 = vector.broadcast %13 : vector<1x256xf32> to vector<8x256xf32>
      %15 = arith.addf %12, %14 : vector<8x256xf32>
      %16 = math.tanh %15 : vector<8x256xf32>
      %c0_14 = arith.constant 0 : index
      %c0_15 = arith.constant 0 : index
      %17 = vector.load %arg6[%c0_14, %c0_15] : memref<8x256xf32, #tpu.memory_space<vmem>>, vector<8x256xf32>
      tpu.vector_store %arg6[%c0_14, %c0_15], %16 {strides = array<i32>} : memref<8x256xf32, #tpu.memory_space<vmem>>, vector<8x256xf32>,
    } else {
    }
    return
  }
  func.func @transform_0(%arg0: i32, %arg1: i32, %arg2: i32) -> (i32, i32) {
    %c0_i32 = arith.constant 0 : i32
    return %arg0, %arg2 : i32, i32
  }
  func.func @transform_1(%arg0: i32, %arg1: i32, %arg2: i32) -> (i32, i32) {
    %c0_i32 = arith.constant 0 : i32
    return %arg2, %arg1 : i32, i32
  }
  func.func @transform_2(%arg0: i32, %arg1: i32, %arg2: i32) -> (i32, i32) {
    %c0_i32 = arith.constant 0 : i32
    %c0_i32_0 = arith.constant 0 : i32
    return %c0_i32, %arg1 : i32, i32
  }
  func.func @transform_3(%arg0: i32, %arg1: i32, %arg2: i32) -> (i32, i32) {
    %c0_i32 = arith.constant 0 : i32
    return %arg0, %arg1 : i32, i32
  }
}

</mosaic_0001>

<llo_original>
// kernel: _tanh_linear_fwd.1
$region0: #{_tanh_linear_fwd.1}
  #allocation0 [shape = 'u32[]', space=smem, size = 0x4, offset = 0x4, fixed_abs, tag = 'smem constant byte address 0x4 - core index']
  #allocation1 [shape = 'u32[72,128]{1,0:T(1,128)}', space=vmem, size = 0x9000, scoped, tag = 'internal scratch']
  %s0 = inlined_call_operand.vmem [shape: bf16[8,256], index: 0, kind: input, shape index: {}]
  %s1 = inlined_call_operand.hbm [shape: bf16[256,256], index: 1, kind: input, shape index: {}]
  %s2 = inlined_call_operand.vmem [shape: f32[1,256], index: 2, kind: input, shape index: {}]
  %s3 = inlined_call_operand.vmem [shape: f32[8,256], index: 3, kind: output, shape index: {}]
  %s4 = sld [smem:[#allocation0]]
  $region34: #{_tanh_linear_fwd.1} parent=0
    _
  %s6 = ssub.s32 1, %s4
  %s7 = scalar_select 0, %s6, %s4
  $region1: #{_tanh_linear_fwd.1} parent=0
    #allocation2 [shape = 'u8[131072]{0}', space=vmem, size = 0x20000, scoped, tag = 'input window, operand 1, single buffered']
    #allocation3 [shape = 's32[1]{0}', space=sflag, size = 0x4, scoped, tag = 'scoped memory for _tanh_linear_fwd.1']
    %8 = vsyncpa [#allocation3], 0
    // Predicated region
    $region2: #{_tanh_linear_fwd.1} parent=1 // pred_check
      _
    $region3: #{_tanh_linear_fwd.1} parent=1 // pred_check_branch
      %10 = sbr.rel (0) target = $region5
    $region4: #{_tanh_linear_fwd.1} parent=1 // pred_region
      _
    $region5: #{_tanh_linear_fwd.1} parent=1 // pred_fallthru
      _
    // Predicated region
    $region6: #{_tanh_linear_fwd.1} parent=1 // pred_check
      _
    $region7: #{_tanh_linear_fwd.1} parent=1 // pred_check_branch
      %12 = sbr.rel (0) target = $region9
    $region8: #{_tanh_linear_fwd.1} parent=1 // pred_region
      %14 = vsyncadd [#allocation3], 0
      %s15 = sshll.u32 %s1, 4
      %s16 = int_to_ptr.hbm [resolvable:$true] %s15
      %s17 = sshll.u32 [#allocation2], 4
      %s18 = int_to_ptr.vmem [resolvable:$true] %s17
      %23 = dma.hbm_to_vmem [thread:$0]  %s16, 4096, %s18, [#allocation3], 128, 128, 8
    $region9: #{_tanh_linear_fwd.1} parent=1 // pred_fallthru
      _
    // Predicated region
    $region10: #{_tanh_linear_fwd.1} parent=1 // pred_check
      _
    $region11: #{_tanh_linear_fwd.1} parent=1 // pred_check_branch
      %25 = sbr.rel (0) target = $region13
    $region12: #{_tanh_linear_fwd.1} parent=1 // pred_region
      _
    $region13: #{_tanh_linear_fwd.1} parent=1 // pred_fallthru
      _
    // Predicated region
    $region14: #{_tanh_linear_fwd.1} parent=1 // pred_check
      _
    $region15: #{_tanh_linear_fwd.1} parent=1 // pred_check_branch
      %27 = sbr.rel (0) target = $region17
    $region16: #{_tanh_linear_fwd.1} parent=1 // pred_region
      %29 = dma.done [#allocation3], 4096
    $region17: #{_tanh_linear_fwd.1} parent=1 // pred_fallthru
      _
    %p30 = scmp.eq.s32.totalorder 0, 0
    // Predicated region
    $region18: #{_tanh_linear_fwd.1} parent=1 // pred_check
      %p31 = pneg %p30
    $region19: #{_tanh_linear_fwd.1} parent=1 // pred_check_branch
      %33 = sbr.rel (%p31) target = $region21
    $region20: #{_tanh_linear_fwd.1} parent=1 // pred_region
      %34 = vst [vmem:[%s3] sm:$0xff] 0.0
      %35 = vst [vmem:[%s3 + $0x8] sm:$0xff] 0.0
    $region21: #{_tanh_linear_fwd.1} parent=1 // pred_fallthru
      _
    %v36 = vld [vmem:[%s3] sm:$0xff]
    %v37 = vld [vmem:[%s3 + $0x8] sm:$0xff]
    %v38 = vld [vmem:[%s0] sm:$0xff]
    %v39 = vld [vmem:[#allocation2] sm:$0xff]
    %v40 = vld [vmem:[#allocation2 + $0x8] sm:$0xff]
    %v41 = vld [vmem:[#allocation2 + $0x10] sm:$0xff]
    %v42 = vld [vmem:[#allocation2 + $0x18] sm:$0xff]
    %v43 = vld [vmem:[#allocation2 + $0x20] sm:$0xff]
    %v44 = vld [vmem:[#allocation2 + $0x28] sm:$0xff]
    %v45 = vld [vmem:[#allocation2 + $0x30] sm:$0xff]
    %v46 = vld [vmem:[#allocation2 + $0x38] sm:$0xff]
    %v47 = vld [vmem:[#allocation2 + $0x40] sm:$0xff]
    %v48 = vld [vmem:[#allocation2 + $0x48] sm:$0xff]
    %v49 = vld [vmem:[#allocation2 + $0x50] sm:$0xff]
    %v50 = vld [vmem:[#allocation2 + $0x58] sm:$0xff]
    %v51 = vld [vmem:[#allocation2 + $0x60] sm:$0xff]
    %v52 = vld [vmem:[#allocation2 + $0x68] sm:$0xff]
    %v53 = vld [vmem:[#allocation2 + $0x70] sm:$0xff]
    %v54 = vld [vmem:[#allocation2 + $0x78] sm:$0xff]
    %v55 = vld [vmem:[#allocation2 + $0x80] sm:$0xff]
    %v56 = vld [vmem:[#allocation2 + $0x88] sm:$0xff]
    %v57 = vld [vmem:[#allocation2 + $0x90] sm:$0xff]
    %v58 = vld [vmem:[#allocation2 + $0x98] sm:$0xff]
    %v59 = vld [vmem:[#allocation2 + $0xa0] sm:$0xff]
    %v60 = vld [vmem:[#allocation2 + $0xa8] sm:$0xff]
    %v61 = vld [vmem:[#allocation2 + $0xb0] sm:$0xff]
    %v62 = vld [vmem:[#allocation2 + $0xb8] sm:$0xff]
    %v63 = vld [vmem:[#allocation2 + $0xc0] sm:$0xff]
    %v64 = vld [vmem:[#allocation2 + $0xc8] sm:$0xff]
    %v65 = vld [vmem:[#allocation2 + $0xd0] sm:$0xff]
    %v66 = vld [vmem:[#allocation2 + $0xd8] sm:$0xff]
    %v67 = vld [vmem:[#allocation2 + $0xe0] sm:$0xff]
    %v68 = vld [vmem:[#allocation2 + $0xe8] sm:$0xff]
    %v69 = vld [vmem:[#allocation2 + $0xf0] sm:$0xff]
    %v70 = vld [vmem:[#allocation2 + $0xf8] sm:$0xff]
    %v72 = vunpack.c.l.b16 %v38
    %v73 = vunpack.c.h.b16 %v38
    %v74 = vpack.c.b16 %v72, %v72
    %v75 = vpack.c.b16 %v73, %v73
    %v110 = vunpack.c.l.b16 %v39
    %v111 = vunpack.c.h.b16 %v39
    %v112 = vunpack.c.l.b16 %v40
    %v113 = vunpack.c.h.b16 %v40
    %v114 = vunpack.c.l.b16 %v41
    %v115 = vunpack.c.h.b16 %v41
    %v116 = vunpack.c.l.b16 %v42
    %v117 = vunpack.c.h.b16 %v42
    %v118 = vunpack.c.l.b16 %v43
    %v119 = vunpack.c.h.b16 %v43
    %v120 = vunpack.c.l.b16 %v44
    %v121 = vunpack.c.h.b16 %v44
    %v122 = vunpack.c.l.b16 %v45
    %v123 = vunpack.c.h.b16 %v45
    %v124 = vunpack.c.l.b16 %v46
    %v125 = vunpack.c.h.b16 %v46
    %v126 = vunpack.c.l.b16 %v47
    %v127 = vunpack.c.h.b16 %v47
    %v128 = vunpack.c.l.b16 %v48
    %v129 = vunpack.c.h.b16 %v48
    %v130 = vunpack.c.l.b16 %v49
    %v131 = vunpack.c.h.b16 %v49
    %v132 = vunpack.c.l.b16 %v50
    %v133 = vunpack.c.h.b16 %v50
    %v134 = vunpack.c.l.b16 %v51
    %v135 = vunpack.c.h.b16 %v51
    %v136 = vunpack.c.l.b16 %v52
    %v137 = vunpack.c.h.b16 %v52
    %v138 = vunpack.c.l.b16 %v53
    %v139 = vunpack.c.h.b16 %v53
    %v140 = vunpack.c.l.b16 %v54
    %v141 = vunpack.c.h.b16 %v54
    %v142 = vunpack.c.l.b16 %v55
    %v143 = vunpack.c.h.b16 %v55
    %v144 = vunpack.c.l.b16 %v56
    %v145 = vunpack.c.h.b16 %v56
    %v146 = vunpack.c.l.b16 %v57
    %v147 = vunpack.c.h.b16 %v57
    %v148 = vunpack.c.l.b16 %v58
    %v149 = vunpack.c.h.b16 %v58
    %v150 = vunpack.c.l.b16 %v59
    %v151 = vunpack.c.h.b16 %v59
    %v152 = vunpack.c.l.b16 %v60
    %v153 = vunpack.c.h.b16 %v60
    %v154 = vunpack.c.l.b16 %v61
    %v155 = vunpack.c.h.b16 %v61
    %v156 = vunpack.c.l.b16 %v62
    %v157 = vunpack.c.h.b16 %v62
    %v158 = vunpack.c.l.b16 %v63
    %v159 = vunpack.c.h.b16 %v63
    %v160 = vunpack.c.l.b16 %v64
    %v161 = vunpack.c.h.b16 %v64
    %v162 = vunpack.c.l.b16 %v65
    %v163 = vunpack.c.h.b16 %v65
    %v164 = vunpack.c.l.b16 %v66
    %v165 = vunpack.c.h.b16 %v66
    %v166 = vunpack.c.l.b16 %v67
    %v167 = vunpack.c.h.b16 %v67
    %v168 = vunpack.c.l.b16 %v68
    %v169 = vunpack.c.h.b16 %v68
    %v170 = vunpack.c.l.b16 %v69
    %v171 = vunpack.c.h.b16 %v69
    %v172 = vunpack.c.l.b16 %v70
    %v173 = vunpack.c.h.b16 %v70
    %v174 = vpack.c.b16 %v112, %v110
    %v175 = vpack.c.b16 %v113, %v111
    %v176 = vpack.c.b16 %v116, %v114
    %v177 = vpack.c.b16 %v117, %v115
    %v178 = vpack.c.b16 %v120, %v118
    %v179 = vpack.c.b16 %v121, %v119
    %v180 = vpack.c.b16 %v124, %v122
    %v181 = vpack.c.b16 %v125, %v123
    %v182 = vpack.c.b16 %v128, %v126
    %v183 = vpack.c.b16 %v129, %v127
    %v184 = vpack.c.b16 %v132, %v130
    %v185 = vpack.c.b16 %v133, %v131
    %v186 = vpack.c.b16 %v136, %v134
    %v187 = vpack.c.b16 %v137, %v135
    %v188 = vpack.c.b16 %v140, %v138
    %v189 = vpack.c.b16 %v141, %v139
    %v190 = vpack.c.b16 %v144, %v142
    %v191 = vpack.c.b16 %v145, %v143
    %v192 = vpack.c.b16 %v148, %v146
    %v193 = vpack.c.b16 %v149, %v147
    %v194 = vpack.c.b16 %v152, %v150
    %v195 = vpack.c.b16 %v153, %v151
    %v196 = vpack.c.b16 %v156, %v154
    %v197 = vpack.c.b16 %v157, %v155
    %v198 = vpack.c.b16 %v160, %v158
    %v199 = vpack.c.b16 %v161, %v159
    %v200 = vpack.c.b16 %v164, %v162
    %v201 = vpack.c.b16 %v165, %v163
    %v202 = vpack.c.b16 %v168, %v166
    %v203 = vpack.c.b16 %v169, %v167
    %v204 = vpack.c.b16 %v172, %v170
    %v205 = vpack.c.b16 %v173, %v171
    %238 = vmatpush.bf16.msra.mxu0 %v188
    %239 = vmatpush.bf16.msra.mxu0 %v186
    %240 = vmatpush.bf16.msra.mxu0 %v184
    %241 = vmatpush.bf16.msra.mxu0 %v182
    %242 = vmatpush.bf16.msra.mxu0 %v180
    %243 = vmatpush.bf16.msra.mxu0 %v178
    %244 = vmatpush.bf16.msra.mxu0 %v176
    %245 = vmatpush.bf16.msra.mxu0 %v174
    %246 = vmatmul.bf16.gmra.mxu0 %v74
    %v247 = vpop.f32.mrf.mxu0
    %v248 = vadd.f32 0.0, %v247
    %v249 = vpop.f32.mrf.mxu0
    %250 = vdwg.mxu0
    %251 = vmatpush.bf16.msra.mxu0 %v204
    %252 = vmatpush.bf16.msra.mxu0 %v202
    %253 = vmatpush.bf16.msra.mxu0 %v200
    %254 = vmatpush.bf16.msra.mxu0 %v198
    %255 = vmatpush.bf16.msra.mxu0 %v196
    %256 = vmatpush.bf16.msra.mxu0 %v194
    %257 = vmatpush.bf16.msra.mxu0 %v192
    %258 = vmatpush.bf16.msra.mxu0 %v190
    %259 = vmatmul.bf16.gmra.mxu0 %v75
    %v260 = vpop.f32.mrf.mxu0
    %v261 = vadd.f32 %v248, %v260
    %v262 = vpop.f32.mrf.mxu0
    %263 = vdwg.mxu0
    %264 = vmatpush.bf16.msra.mxu0 %v189
    %265 = vmatpush.bf16.msra.mxu0 %v187
    %266 = vmatpush.bf16.msra.mxu0 %v185
    %267 = vmatpush.bf16.msra.mxu0 %v183
    %268 = vmatpush.bf16.msra.mxu0 %v181
    %269 = vmatpush.bf16.msra.mxu0 %v179
    %270 = vmatpush.bf16.msra.mxu0 %v177
    %271 = vmatpush.bf16.msra.mxu0 %v175
    %272 = vmatmul.bf16.gmra.mxu0 %v74
    %v273 = vpop.f32.mrf.mxu0
    %v274 = vadd.f32 0.0, %v273
    %v275 = vpop.f32.mrf.mxu0
    %276 = vdwg.mxu0
    %277 = vmatpush.bf16.msra.mxu0 %v205
    %278 = vmatpush.bf16.msra.mxu0 %v203
    %279 = vmatpush.bf16.msra.mxu0 %v201
    %280 = vmatpush.bf16.msra.mxu0 %v199
    %281 = vmatpush.bf16.msra.mxu0 %v197
    %282 = vmatpush.bf16.msra.mxu0 %v195
    %283 = vmatpush.bf16.msra.mxu0 %v193
    %284 = vmatpush.bf16.msra.mxu0 %v191
    %285 = vmatmul.bf16.gmra.mxu0 %v75
    %v286 = vpop.f32.mrf.mxu0
    %v287 = vadd.f32 %v274, %v286
    %v288 = vpop.f32.mrf.mxu0
    %289 = vdwg.mxu0
    %v290 = vadd.f32 %v36, %v261
    %v291 = vadd.f32 %v37, %v287
    %292 = vst [vmem:[%s3] sm:$0xff] %v290
    %293 = vst [vmem:[%s3 + $0x8] sm:$0xff] %v291
    // Predicated region
    $region22: #{_tanh_linear_fwd.1} parent=1 // pred_check
      %p294 = pneg %p30
    $region23: #{_tanh_linear_fwd.1} parent=1 // pred_check_branch
      %296 = sbr.rel (%p294) target = $region25
    $region24: #{_tanh_linear_fwd.1} parent=1 // pred_region
      %v297 = vld [vmem:[%s3] sm:$0xff]
      %v298 = vld [vmem:[%s3 + $0x8] sm:$0xff]
      %v299 = vld [vmem:[%s2] sm:$0x3]
      %v301 = vperm.slane %v299, 0
      %v302 = vperm.slane %v299, 1
      %v305 = vadd.f32 %v297, %v301
      %v306 = vadd.f32 %v298, %v302
      %v307 = vtanh.pop %v305
      %v308 = vtanh.pop %v306
      %309 = vst [vmem:[%s3] sm:$0xff] %v307
      %310 = vst [vmem:[%s3 + $0x8] sm:$0xff] %v308
    $region25: #{_tanh_linear_fwd.1} parent=1 // pred_fallthru
      _
    // Predicated region
    $region26: #{_tanh_linear_fwd.1} parent=1 // pred_check
      _
    $region27: #{_tanh_linear_fwd.1} parent=1 // pred_check_branch
      %312 = sbr.rel (0) target = $region29
    $region28: #{_tanh_linear_fwd.1} parent=1 // pred_region
      _
    $region29: #{_tanh_linear_fwd.1} parent=1 // pred_fallthru
      _
    // Predicated region
    $region30: #{_tanh_linear_fwd.1} parent=1 // pred_check
      _
    $region31: #{_tanh_linear_fwd.1} parent=1 // pred_check_branch
      %314 = sbr.rel (0) target = $region33
    $region32: #{_tanh_linear_fwd.1} parent=1 // pred_region
      _
    $region33: #{_tanh_linear_fwd.1} parent=1 // pred_fallthru
      _
    %315 = vsyncpa [#allocation3], 1

</llo_original>
